<compile_context>
chip_gen: v6e
topology: v6e:2x2x1
jax: 0.10.0
libtpu: 0.0.40
codegen_flags: <defaults>
</compile_context>

<pallas_src>
import functools

import numpy as np
import jax
import jax.numpy as jnp
from jax import lax
from jax.experimental import pallas as pl
from jax.experimental.pallas import tpu as pltpu


# ---------------------------------------------------------------------------
# Kernel 1: nearest-neighbour 2x spatial upsample (NCHW -> NCHW).
# ---------------------------------------------------------------------------
def _upsample2x_kernel(x_ref, e_ref, o_ref):
    # x_ref: (R, W)   one row per (b, c, i) of the NCHW input.
    # e_ref: (W, 2W)  0/1 expansion matrix: (x @ E)[r, k] == x[r, k // 2].
    # o_ref: (R, 4W)  free view of the NCHW output: row nh holds output rows
    #                 2i and 2i+1 (identical) back to back.
    row_up = jnp.dot(
        x_ref[...], e_ref[...], preferred_element_type=jnp.float32
    ).astype(o_ref.dtype)
    o_ref[...] = jnp.concatenate([row_up, row_up], axis=-1)


def upsample_nearest2x_pallas(x, *, rows_per_tile=1024):
    """Nearest 2x upsample of an NCHW tensor: (B,C,H,W) -> (B,C,2H,2W)."""
    B, C, H, W = x.shape
    N = B * C * H

    # Free (contiguous) views -- no HBM transposes anywhere.
    x2 = x.reshape(N, W)

    # Exact 0/1 expansion matrix (dup each element along W).
    j = np.arange(W)[:, None]
    k = np.arange(2 * W)[None, :]
    e = jnp.asarray(k // 2 == j, dtype=x.dtype)

    # Large row tiles, capped so double-buffered in+out blocks stay well under
    # the default scoped-VMEM limit (v7x: 32 MiB scoped / 64 MiB physical).
    itemsize = np.dtype(x.dtype).itemsize
    bytes_per_row = 5 * W * itemsize                      # W in + 4W out
    vmem_budget = 16 * 1024 * 1024
    r_cap = max(8, (vmem_budget // (2 * bytes_per_row)) // 8 * 8)
    tile_r = min(N, rows_per_tile, r_cap)
    if tile_r < N:
        tile_r = max(8, (tile_r // 8) * 8)
    grid = (pl.cdiv(N, tile_r),)

    out2 = pl.pallas_call(
        _upsample2x_kernel,
        out_shape=jax.ShapeDtypeStruct((N, 4 * W), x.dtype),
        grid_spec=pltpu.PrefetchScalarGridSpec(
            num_scalar_prefetch=0,
            grid=grid,
            in_specs=[
                pl.BlockSpec((tile_r, W), lambda i: (i, 0)),
                pl.BlockSpec((W, 2 * W), lambda i: (0, 0)),
            ],
            out_specs=pl.BlockSpec((tile_r, 4 * W), lambda i: (i, 0)),
        ),
        compiler_params=pltpu.CompilerParams(
            dimension_semantics=("parallel",)),
    )(x2, e)

    return out2.reshape(B, C, 2 * H, 2 * W)


# ---------------------------------------------------------------------------
# Kernel 2: 3x3 conv, stride 1, padding 1 (with_conv=True branch), NCHW/OIHW.
# Whole-plane formulation: 9 lane-shifted matmuls on the flat (Ci, Hp*Wp) view.
# ---------------------------------------------------------------------------
def _conv3x3_kernel(x_ref, w_ref, b_ref, o_ref, *, hp, wp):
    # x_ref: (1, Ci, HW)  flat spatial view of one batch element (HW = Hp*Wp)
    # w_ref: (9, Co, Ci)  conv taps, index k = 3*di + dj
    # b_ref: (Co, 1)
    # o_ref: (1, Co, HW)
    ci = x_ref.shape[1]
    co = o_ref.shape[1]
    hw = hp * wp

    x = x_ref[0].astype(jnp.float32)                          # (Ci, HW)
    col = lax.broadcasted_iota(jnp.int32, (1, hw), 1) % wp    # column of flat p
    zc = jnp.zeros((ci, 1), dtype=jnp.float32)
    zr = jnp.zeros((ci, wp), dtype=jnp.float32)

    acc = jnp.zeros((co, hw), dtype=jnp.float32)
    for dj in range(3):
        # Column shift by (dj - 1) with zero fill + column-edge mask.  The
        # mask plus zero-fill shifts reproduce the implicit zero padding
        # exactly (row-boundary corner cases are covered by the column mask).
        if dj == 0:        # source column w-1 (zero at left edge)
            xc = jnp.where(col >= 1,
                           jnp.concatenate([zc, x[:, : hw - 1]], axis=1), 0.0)
        elif dj == 1:      # source column w
            xc = x
        else:              # source column w+1 (zero at right edge)
            xc = jnp.where(col <= wp - 2,
                           jnp.concatenate([x[:, 1:], zc], axis=1), 0.0)
        for di in range(3):
            # Row shift by (di - 1): a flat shift by +-Wp with zero fill.
            if di == 0:    # source row h-1
                xs = jnp.concatenate([zr, xc[:, : hw - wp]], axis=1)
            elif di == 1:  # source row h
                xs = xc
            else:          # source row h+1
                xs = jnp.concatenate([xc[:, wp:], zr], axis=1)
            wk = w_ref[3 * di + dj].astype(jnp.float32)       # (Co, Ci)
            acc = acc + jnp.dot(wk, xs, preferred_element_type=jnp.float32)

    o_ref[0] = (acc + b_ref[...].astype(jnp.float32)).astype(o_ref.dtype)


def conv3x3_pallas(h, w, b):
    """3x3 conv, stride 1, padding 1; h: (B,Ci,Hp,Wp), w: (Co,Ci,3,3), b: (Co,)."""
    B, Ci, Hp, Wp = h.shape
    Co = w.shape[0]
    HW = Hp * Wp

    h2 = h.reshape(B, Ci, HW)                                # free contiguous view
    w9 = jnp.transpose(w, (2, 3, 0, 1)).reshape(9, Co, Ci)   # tap-major, tiny
    b2 = b.reshape(Co, 1)

    # TODO(synk): tile the flat spatial axis (with a one-row halo) and/or Ci
    # for feature maps too large to hold one batch element's planes in VMEM
    # (fine at typical decoder-upsample sizes).
    out2 = pl.pallas_call(
        functools.partial(_conv3x3_kernel, hp=Hp, wp=Wp),
        out_shape=jax.ShapeDtypeStruct((B, Co, HW), h.dtype),
        grid_spec=pltpu.PrefetchScalarGridSpec(
            num_scalar_prefetch=0,
            grid=(B,),
            in_specs=[
                pl.BlockSpec((1, Ci, HW), lambda bi: (bi, 0, 0)),
                pl.BlockSpec((9, Co, Ci), lambda bi: (0, 0, 0)),
                pl.BlockSpec((Co, 1), lambda bi: (0, 0)),
            ],
            out_specs=pl.BlockSpec((1, Co, HW), lambda bi: (bi, 0, 0)),
        ),
        compiler_params=pltpu.CompilerParams(
            dimension_semantics=("parallel",)),
    )(h2, w9, b2)

    return out2.reshape(B, Co, Hp, Wp)


# ---------------------------------------------------------------------------
# Module-level forward (mirrors Upsample.forward).
# ---------------------------------------------------------------------------
def upsample_forward(x, *, with_conv=False, conv_w=None, conv_b=None):
    h = upsample_nearest2x_pallas(x)
    if with_conv:
        # TODO(synk): fuse the upsample into the conv kernel to skip one HBM
        # round trip of the 4x-sized intermediate when with_conv=True.
        h = conv3x3_pallas(h, conv_w, conv_b)
    return h


def ddpm_conv_init(key, shape, scale=1.0):
    """default_init: variance_scaling(scale, 'fan_avg', 'uniform') on OIHW."""
    scale = 1e-10 if scale == 0 else scale
    receptive = shape[2] * shape[3]
    fan_in = shape[1] * receptive
    fan_out = shape[0] * receptive
    variance = scale / ((fan_in + fan_out) / 2.0)
    limit = np.sqrt(3.0 * variance)
    return (jax.random.uniform(key, shape, dtype=jnp.float32) * 2.0 - 1.0) * limit


if __name__ == "__main__":
    key = jax.random.PRNGKey(0)
    k_x, k_w = jax.random.split(key)

    B, C, H, W = 2, 4, 16, 16
    out_ch = C                                # Upsample default: out_ch = in_ch

    x = jax.random.normal(k_x, (B, C, H, W), dtype=jnp.float32)

    # ---- with_conv=False (module default) ----
    y = upsample_forward(x)
    jax.block_until_ready(y)
    assert y.shape == (B, C, 2 * H, 2 * W)
    ref_up = jnp.repeat(jnp.repeat(x, 2, axis=2), 2, axis=3)
    np.testing.assert_allclose(np.asarray(y), np.asarray(ref_up),
                               rtol=0.0, atol=1e-6)

    # ---- with_conv=True ----
    conv_w = ddpm_conv_init(k_w, (out_ch, C, 3, 3), scale=1.0)
    conv_b = jnp.zeros((out_ch,), dtype=jnp.float32)
    y2 = upsample_forward(x, with_conv=True, conv_w=conv_w, conv_b=conv_b)
    jax.block_until_ready(y2)
    assert y2.shape == (B, out_ch, 2 * H, 2 * W)
    ref_conv = lax.conv_general_dilated(
        ref_up, conv_w, window_strides=(1, 1), padding=((1, 1), (1, 1)),
        dimension_numbers=("NCHW", "OIHW", "NCHW"),
        precision=lax.Precision.HIGHEST,
    ) + conv_b.reshape(1, out_ch, 1, 1)
    np.testing.assert_allclose(np.asarray(y2), np.asarray(ref_conv),
                               rtol=1e-4, atol=1e-4)

    print("KERNEL_OK")
</pallas_src>

<mosaic_0001>
module attributes {stable_mosaic.version = 11 : i64} {
  func.func @_upsample2x_kernel(%arg0: i32, %arg1: memref<128x16xf32, #tpu.memory_space<vmem>>, %arg2: memref<16x32xf32, #tpu.memory_space<vmem>>, %arg3: memref<128x64xf32, #tpu.memory_space<vmem>>) attributes {dimension_semantics = [#tpu.dimension_semantics<parallel>], iteration_bounds = array<i64: 1>, scalar_prefetch = 0 : i64, scratch_operands = 0 : i64, tpu.core_type = #tpu.core_type<tc>, window_params = [{transform_indices = @transform_0, window_bounds = array<i64: 128, 16>}, {pipeline_mode = #tpu.pipeline_mode<synchronous>, transform_indices = @transform_1, window_bounds = array<i64: 16, 32>}, {transform_indices = @transform_2, window_bounds = array<i64: 128, 64>}]} {
    %c0 = arith.constant 0 : index
    %c0_0 = arith.constant 0 : index
    %0 = vector.load %arg1[%c0, %c0_0] : memref<128x16xf32, #tpu.memory_space<vmem>>, vector<128x16xf32>
    %c0_1 = arith.constant 0 : index
    %c0_2 = arith.constant 0 : index
    %1 = vector.load %arg2[%c0_1, %c0_2] : memref<16x32xf32, #tpu.memory_space<vmem>>, vector<16x32xf32>
    %cst = arith.constant dense<0.000000e+00> : vector<128x32xf32>
    %2 = tpu.matmul %0, %1, %cst {dimension_numbers = #tpu.dot_dimension_numbers<[1], [0], [0], [1], [0, 0, 1, 1], [], []>} : vector<128x16xf32>, vector<16x32xf32>, vector<128x32xf32> -> vector<128x32xf32>
    %3 = tpu.concatenate %2, %2 in 1 : vector<128x32xf32>, vector<128x32xf32> -> vector<128x64xf32>
    %c0_3 = arith.constant 0 : index
    %c0_4 = arith.constant 0 : index
    %4 = vector.load %arg3[%c0_3, %c0_4] : memref<128x64xf32, #tpu.memory_space<vmem>>, vector<128x64xf32>
    tpu.vector_store %arg3[%c0_3, %c0_4], %3 {strides = array<i32>} : memref<128x64xf32, #tpu.memory_space<vmem>>, vector<128x64xf32>,
    return
  }
  func.func @transform_0(%arg0: i32) -> (i32, i32) {
    %c0_i32 = arith.constant 0 : i32
    %c0_i32_0 = arith.constant 0 : i32
    return %arg0, %c0_i32 : i32, i32
  }
  func.func @transform_1(%arg0: i32) -> (i32, i32) {
    %c0_i32 = arith.constant 0 : i32
    %c0_i32_0 = arith.constant 0 : i32
    %c0_i32_1 = arith.constant 0 : i32
    return %c0_i32, %c0_i32_0 : i32, i32
  }
  func.func @transform_2(%arg0: i32) -> (i32, i32) {
    %c0_i32 = arith.constant 0 : i32
    %c0_i32_0 = arith.constant 0 : i32
    return %arg0, %c0_i32 : i32, i32
  }
}

</mosaic_0001>

<llo_original>
// kernel: tpu_custom_call.1
$region0: #{tpu_custom_call.1}
  #allocation0 [shape = 'u32[]', space=smem, size = 0x4, offset = 0x4, fixed_abs, tag = 'smem constant byte address 0x4 - core index']
  #allocation1 [shape = 'u32[144,128]{1,0:T(1,128)}', space=vmem, size = 0x12000, scoped, tag = 'internal scratch']
  %s0 = inlined_call_operand.vmem [shape: f32[128,16], index: 0, kind: input, shape index: {}]
  %s1 = inlined_call_operand.vmem [shape: f32[16,32], index: 1, kind: input, shape index: {}]
  %s2 = inlined_call_operand.vmem [shape: f32[128,64], index: 2, kind: output, shape index: {}]
  %s3 = sld [smem:[#allocation0]]
  $region18: #{tpu_custom_call.1} parent=0
    _
  %s5 = ssub.s32 1, %s3
  %s6 = scalar_select 0, %s5, %s3
  // Predicated region
  $region2: #{tpu_custom_call.1} parent=0 // pred_check
    _
  $region3: #{tpu_custom_call.1} parent=0 // pred_check_branch
    %8 = sbr.rel (0) target = $region5
  $region4: #{tpu_custom_call.1} parent=0 // pred_region
    _
  $region5: #{tpu_custom_call.1} parent=0 // pred_fallthru
    _
  // Predicated region
  $region6: #{tpu_custom_call.1} parent=0 // pred_check
    _
  $region7: #{tpu_custom_call.1} parent=0 // pred_check_branch
    %10 = sbr.rel (0) target = $region9
  $region8: #{tpu_custom_call.1} parent=0 // pred_region
    _
  $region9: #{tpu_custom_call.1} parent=0 // pred_fallthru
    _
  %v11 = vld [vmem:[%s0] sm:$0xff]
  %v12 = vld [vmem:[%s0 + $0x8] sm:$0xff]
  %v13 = vld [vmem:[%s0 + $0x10] sm:$0xff]
  %v14 = vld [vmem:[%s0 + $0x18] sm:$0xff]
  %v15 = vld [vmem:[%s0 + $0x20] sm:$0xff]
  %v16 = vld [vmem:[%s0 + $0x28] sm:$0xff]
  %v17 = vld [vmem:[%s0 + $0x30] sm:$0xff]
  %v18 = vld [vmem:[%s0 + $0x38] sm:$0xff]
  %v19 = vld [vmem:[%s0 + $0x40] sm:$0xff]
  %v20 = vld [vmem:[%s0 + $0x48] sm:$0xff]
  %v21 = vld [vmem:[%s0 + $0x50] sm:$0xff]
  %v22 = vld [vmem:[%s0 + $0x58] sm:$0xff]
  %v23 = vld [vmem:[%s0 + $0x60] sm:$0xff]
  %v24 = vld [vmem:[%s0 + $0x68] sm:$0xff]
  %v25 = vld [vmem:[%s0 + $0x70] sm:$0xff]
  %v26 = vld [vmem:[%s0 + $0x78] sm:$0xff]
  %v27 = vld [vmem:[%s1] sm:$0xff]
  %v28 = vld [vmem:[%s1 + $0x8] sm:$0xff]
  %vm29 = vcmask 130048
  %v31 = vsel %vm29, %v11, 0
  %v34 = vsel %vm29, %v12, 0
  %v37 = vsel %vm29, %v13, 0
  %v40 = vsel %vm29, %v14, 0
  %v43 = vsel %vm29, %v15, 0
  %v46 = vsel %vm29, %v16, 0
  %v49 = vsel %vm29, %v17, 0
  %v52 = vsel %vm29, %v18, 0
  %v55 = vsel %vm29, %v19, 0
  %v58 = vsel %vm29, %v20, 0
  %v61 = vsel %vm29, %v21, 0
  %v64 = vsel %vm29, %v22, 0
  %v67 = vsel %vm29, %v23, 0
  %v70 = vsel %vm29, %v24, 0
  %v73 = vsel %vm29, %v25, 0
  %v76 = vsel %vm29, %v26, 0
  %78 = vmatprep.subr.mxu0 0.0
  %79 = vmatpush1.msra.mxu0 0.0
  %80 = vmatprep.subr.mxu0 0.0
  %81 = vmatpush1.msra.mxu0 0.0
  %82 = vmatprep.subr.mxu0 0.0
  %83 = vmatpush1.msra.mxu0 0.0
  %84 = vmatprep.subr.mxu0 0.0
  %85 = vmatpush1.msra.mxu0 0.0
  %86 = vmatprep.subr.mxu0 0.0
  %87 = vmatpush1.msra.mxu0 0.0
  %88 = vmatprep.subr.mxu0 0.0
  %89 = vmatpush1.msra.mxu0 0.0
  %90 = vmatprep.subr.mxu0 0.0
  %91 = vmatpush1.msra.mxu0 0.0
  %92 = vmatprep.subr.mxu0 0.0
  %93 = vmatpush1.msra.mxu0 0.0
  %94 = vmatprep.subr.mxu0 0.0
  %95 = vmatpush1.msra.mxu0 0.0
  %96 = vmatprep.subr.mxu0 0.0
  %97 = vmatpush1.msra.mxu0 0.0
  %98 = vmatprep.subr.mxu0 0.0
  %99 = vmatpush1.msra.mxu0 0.0
  %100 = vmatprep.subr.mxu0 0.0
  %101 = vmatpush1.msra.mxu0 0.0
  %102 = vmatprep.subr.mxu0 0.0
  %103 = vmatpush1.msra.mxu0 0.0
  %104 = vmatprep.subr.mxu0 0.0
  %105 = vmatpush1.msra.mxu0 0.0
  %106 = vmatprep.subr.mxu0 0.0
  %107 = vmatpush1.msra.mxu0 %v28
  %108 = vmatprep.subr.mxu0 0.0
  %109 = vmatpush1.msra.mxu0 %v27
  %110 = vmatprep.subr.mxu0 0.0
  %111 = vmatpush2.msra.mxu0 0.0
  %112 = vmatprep.subr.mxu0 0.0
  %113 = vmatpush2.msra.mxu0 0.0
  %114 = vmatprep.subr.mxu0 0.0
  %115 = vmatpush2.msra.mxu0 0.0
  %116 = vmatprep.subr.mxu0 0.0
  %117 = vmatpush2.msra.mxu0 0.0
  %118 = vmatprep.subr.mxu0 0.0
  %119 = vmatpush2.msra.mxu0 0.0
  %120 = vmatprep.subr.mxu0 0.0
  %121 = vmatpush2.msra.mxu0 0.0
  %122 = vmatprep.subr.mxu0 0.0
  %123 = vmatpush2.msra.mxu0 0.0
  %124 = vmatprep.subr.mxu0 0.0
  %125 = vmatpush2.msra.mxu0 0.0
  %126 = vmatprep.subr.mxu0 0.0
  %127 = vmatpush2.msra.mxu0 0.0
  %128 = vmatprep.subr.mxu0 0.0
  %129 = vmatpush2.msra.mxu0 0.0
  %130 = vmatprep.subr.mxu0 0.0
  %131 = vmatpush2.msra.mxu0 0.0
  %132 = vmatprep.subr.mxu0 0.0
  %133 = vmatpush2.msra.mxu0 0.0
  %134 = vmatprep.subr.mxu0 0.0
  %135 = vmatpush2.msra.mxu0 0.0
  %136 = vmatprep.subr.mxu0 0.0
  %137 = vmatpush2.msra.mxu0 0.0
  %138 = vmatprep.subr.mxu0 0.0
  %139 = vmatpush2.msra.mxu0 0.0
  %140 = vmatprep.subr.mxu0 0.0
  %141 = vmatpush2.msra.mxu0 0.0
  %142 = vmatprep.mubr.f32.mxu0 0.0
  %143 = vmatmul.mubr.f32.gmra.mxu0 %v31
  %v144 = vpop.f32.mrf.mxu0
  %v145 = vadd.f32 0.0, %v144
  %v146 = vpop.f32.mrf.mxu0
  %147 = vmatprep.mubr.f32.mxu0 0.0
  %148 = vmatmul.mubr.f32.gmra.mxu0 %v34
  %v149 = vpop.f32.mrf.mxu0
  %v150 = vadd.f32 0.0, %v149
  %v151 = vpop.f32.mrf.mxu0
  %152 = vmatprep.mubr.f32.mxu0 0.0
  %153 = vmatmul.mubr.f32.gmra.mxu0 %v37
  %v154 = vpop.f32.mrf.mxu0
  %v155 = vadd.f32 0.0, %v154
  %v156 = vpop.f32.mrf.mxu0
  %157 = vmatprep.mubr.f32.mxu0 0.0
  %158 = vmatmul.mubr.f32.gmra.mxu0 %v40
  %v159 = vpop.f32.mrf.mxu0
  %v160 = vadd.f32 0.0, %v159
  %v161 = vpop.f32.mrf.mxu0
  %162 = vmatprep.mubr.f32.mxu0 0.0
  %163 = vmatmul.mubr.f32.gmra.mxu0 %v43
  %v164 = vpop.f32.mrf.mxu0
  %v165 = vadd.f32 0.0, %v164
  %v166 = vpop.f32.mrf.mxu0
  %167 = vmatprep.mubr.f32.mxu0 0.0
  %168 = vmatmul.mubr.f32.gmra.mxu0 %v46
  %v169 = vpop.f32.mrf.mxu0
  %v170 = vadd.f32 0.0, %v169
  %v171 = vpop.f32.mrf.mxu0
  %172 = vmatprep.mubr.f32.mxu0 0.0
  %173 = vmatmul.mubr.f32.gmra.mxu0 %v49
  %v174 = vpop.f32.mrf.mxu0
  %v175 = vadd.f32 0.0, %v174
  %v176 = vpop.f32.mrf.mxu0
  %177 = vmatprep.mubr.f32.mxu0 0.0
  %178 = vmatmul.mubr.f32.gmra.mxu0 %v52
  %v179 = vpop.f32.mrf.mxu0
  %v180 = vadd.f32 0.0, %v179
  %v181 = vpop.f32.mrf.mxu0
  %182 = vmatprep.mubr.f32.mxu0 0.0
  %183 = vmatmul.mubr.f32.gmra.mxu0 %v55
  %v184 = vpop.f32.mrf.mxu0
  %v185 = vadd.f32 0.0, %v184
  %v186 = vpop.f32.mrf.mxu0
  %187 = vmatprep.mubr.f32.mxu0 0.0
  %188 = vmatmul.mubr.f32.gmra.mxu0 %v58
  %v189 = vpop.f32.mrf.mxu0
  %v190 = vadd.f32 0.0, %v189
  %v191 = vpop.f32.mrf.mxu0
  %192 = vmatprep.mubr.f32.mxu0 0.0
  %193 = vmatmul.mubr.f32.gmra.mxu0 %v61
  %v194 = vpop.f32.mrf.mxu0
  %v195 = vadd.f32 0.0, %v194
  %v196 = vpop.f32.mrf.mxu0
  %197 = vmatprep.mubr.f32.mxu0 0.0
  %198 = vmatmul.mubr.f32.gmra.mxu0 %v64
  %v199 = vpop.f32.mrf.mxu0
  %v200 = vadd.f32 0.0, %v199
  %v201 = vpop.f32.mrf.mxu0
  %202 = vmatprep.mubr.f32.mxu0 0.0
  %203 = vmatmul.mubr.f32.gmra.mxu0 %v67
  %v204 = vpop.f32.mrf.mxu0
  %v205 = vadd.f32 0.0, %v204
  %v206 = vpop.f32.mrf.mxu0
  %207 = vmatprep.mubr.f32.mxu0 0.0
  %208 = vmatmul.mubr.f32.gmra.mxu0 %v70
  %v209 = vpop.f32.mrf.mxu0
  %v210 = vadd.f32 0.0, %v209
  %v211 = vpop.f32.mrf.mxu0
  %212 = vmatprep.mubr.f32.mxu0 0.0
  %213 = vmatmul.mubr.f32.gmra.mxu0 %v73
  %v214 = vpop.f32.mrf.mxu0
  %v215 = vadd.f32 0.0, %v214
  %v216 = vpop.f32.mrf.mxu0
  %217 = vmatprep.mubr.f32.mxu0 0.0
  %218 = vmatmul.mubr.f32.gmra.mxu0 %v76
  %v219 = vpop.f32.mrf.mxu0
  %v220 = vadd.f32 0.0, %v219
  %v221 = vpop.f32.mrf.mxu0
  %222 = vdwg.mxu0
  %239 = vrot.lane.b32.xlu0 %v145, 32
  %v240 = vpop.permute.xlu0 %239
  %241 = vrot.lane.b32.xlu0 %v150, 32
  %v242 = vpop.permute.xlu0 %241
  %243 = vrot.lane.b32.xlu0 %v155, 32
  %v244 = vpop.permute.xlu0 %243
  %245 = vrot.lane.b32.xlu0 %v160, 32
  %v246 = vpop.permute.xlu0 %245
  %247 = vrot.lane.b32.xlu0 %v165, 32
  %v248 = vpop.permute.xlu0 %247
  %249 = vrot.lane.b32.xlu0 %v170, 32
  %v250 = vpop.permute.xlu0 %249
  %251 = vrot.lane.b32.xlu0 %v175, 32
  %v252 = vpop.permute.xlu0 %251
  %253 = vrot.lane.b32.xlu0 %v180, 32
  %v254 = vpop.permute.xlu0 %253
  %255 = vrot.lane.b32.xlu0 %v185, 32
  %v256 = vpop.permute.xlu0 %255
  %257 = vrot.lane.b32.xlu0 %v190, 32
  %v258 = vpop.permute.xlu0 %257
  %259 = vrot.lane.b32.xlu0 %v195, 32
  %v260 = vpop.permute.xlu0 %259
  %261 = vrot.lane.b32.xlu0 %v200, 32
  %v262 = vpop.permute.xlu0 %261
  %263 = vrot.lane.b32.xlu0 %v205, 32
  %v264 = vpop.permute.xlu0 %263
  %265 = vrot.lane.b32.xlu0 %v210, 32
  %v266 = vpop.permute.xlu0 %265
  %267 = vrot.lane.b32.xlu0 %v215, 32
  %v268 = vpop.permute.xlu0 %267
  %269 = vrot.lane.b32.xlu0 %v220, 32
  %v270 = vpop.permute.xlu0 %269
  %vm287 = vcmask 261120
  %v288 = vsel %vm287, %v145, %v240
  %v289 = vsel %vm287, %v150, %v242
  %v290 = vsel %vm287, %v155, %v244
  %v291 = vsel %vm287, %v160, %v246
  %v292 = vsel %vm287, %v165, %v248
  %v293 = vsel %vm287, %v170, %v250
  %v294 = vsel %vm287, %v175, %v252
  %v295 = vsel %vm287, %v180, %v254
  %v296 = vsel %vm287, %v185, %v256
  %v297 = vsel %vm287, %v190, %v258
  %v298 = vsel %vm287, %v195, %v260
  %v299 = vsel %vm287, %v200, %v262
  %v300 = vsel %vm287, %v205, %v264
  %v301 = vsel %vm287, %v210, %v266
  %v302 = vsel %vm287, %v215, %v268
  %v303 = vsel %vm287, %v220, %v270
  %vm304 = vcmask 523264
  %305 = vst.msk [vmem:[%s2] sm:$0xff] %vm304, %v288
  %306 = vst.msk [vmem:[%s2 + $0x8] sm:$0xff] %vm304, %v289
  %307 = vst.msk [vmem:[%s2 + $0x10] sm:$0xff] %vm304, %v290
  %308 = vst.msk [vmem:[%s2 + $0x18] sm:$0xff] %vm304, %v291
  %309 = vst.msk [vmem:[%s2 + $0x20] sm:$0xff] %vm304, %v292
  %310 = vst.msk [vmem:[%s2 + $0x28] sm:$0xff] %vm304, %v293
  %311 = vst.msk [vmem:[%s2 + $0x30] sm:$0xff] %vm304, %v294
  %312 = vst.msk [vmem:[%s2 + $0x38] sm:$0xff] %vm304, %v295
  %313 = vst.msk [vmem:[%s2 + $0x40] sm:$0xff] %vm304, %v296
  %314 = vst.msk [vmem:[%s2 + $0x48] sm:$0xff] %vm304, %v297
  %315 = vst.msk [vmem:[%s2 + $0x50] sm:$0xff] %vm304, %v298
  %316 = vst.msk [vmem:[%s2 + $0x58] sm:$0xff] %vm304, %v299
  %317 = vst.msk [vmem:[%s2 + $0x60] sm:$0xff] %vm304, %v300
  %318 = vst.msk [vmem:[%s2 + $0x68] sm:$0xff] %vm304, %v301
  %319 = vst.msk [vmem:[%s2 + $0x70] sm:$0xff] %vm304, %v302
  %320 = vst.msk [vmem:[%s2 + $0x78] sm:$0xff] %vm304, %v303
  // Predicated region
  $region10: #{tpu_custom_call.1} parent=0 // pred_check
    _
  $region11: #{tpu_custom_call.1} parent=0 // pred_check_branch
    %322 = sbr.rel (0) target = $region13
  $region12: #{tpu_custom_call.1} parent=0 // pred_region
    _
  $region13: #{tpu_custom_call.1} parent=0 // pred_fallthru
    _
  // Predicated region
  $region14: #{tpu_custom_call.1} parent=0 // pred_check
    _
  $region15: #{tpu_custom_call.1} parent=0 // pred_check_branch
    %324 = sbr.rel (0) target = $region17
  $region16: #{tpu_custom_call.1} parent=0 // pred_region
    _
  $region17: #{tpu_custom_call.1} parent=0 // pred_fallthru
    _

</llo_original>
